<compile_context>
chip_gen: v7x
topology: tpu7x:2x2x1
jax: 0.10.0
libtpu: 0.0.40
codegen_flags: <defaults>
</compile_context>

<pallas_src>
import functools

import jax
import jax.numpy as jnp
from jax.experimental import pallas as pl
from jax.experimental.pallas import tpu as pltpu


def _cdiv(a, b):
    return -(-a // b)


def _layernorm_kernel(*refs, eps, d_true, dynamic_eps):
    # refs: [eps_ref (SMEM, only if dynamic_eps)], x_ref (br, Dp),
    #       a_ref (1, Dp) f32, b_ref (1, Dp) f32, o_ref (br, Dp)
    if dynamic_eps:
        eps_ref, x_ref, a_ref, b_ref, o_ref = refs
        eps_val = eps_ref[0]
    else:
        x_ref, a_ref, b_ref, o_ref = refs
        eps_val = eps

    x = x_ref[...].astype(jnp.float32)
    inv_d = 1.0 / d_true
    # Single-pass moments: var = E[x^2] - mean^2 (clamped against cancellation).
    # Divisor is the true d_model, so zero lane-padding does not bias the stats.
    mean = jnp.sum(x, axis=-1, keepdims=True) * inv_d
    mean2 = jnp.sum(x * x, axis=-1, keepdims=True) * inv_d
    var = jnp.maximum(mean2 - mean * mean, 0.0)
    inv_std = jax.lax.rsqrt(var + eps_val)          # EUP, rides under the DMA
    # torch: a_2 * (x - mean) / std + b_2
    o_ref[...] = ((x - mean) * inv_std * a_ref[...] + b_ref[...]).astype(o_ref.dtype)


def _tpu_generation():
    """Best-effort chip detection -> (is_v7x, vmem_budget_bytes, vmem_clamp_bytes)."""
    kind = ""
    try:
        kind = (getattr(jax.devices()[0], "device_kind", "") or "").lower()
    except Exception:
        pass
    is_v7x = ("v7" in kind) or ("7x" in kind)
    if is_v7x or not kind or "tpu" not in kind:
        # v7x (64 MiB physical VMEM) or unknown backend: stay conservative.
        return is_v7x, 24 << 20, 48 << 20
    # v5e / v6e / other 128 MiB-VMEM parts: bigger tiles are safe.
    return False, 48 << 20, 96 << 20


def layer_norm(x, a_2, b_2, *, eps=1e-5, pb_relax=False, block_rows=None):
    """Pallas LayerNorm over the last axis of `x`.

    x:   (..., d_model)
    a_2: (d_model,)  scale
    b_2: (d_model,)  bias
    """
    orig_shape = x.shape
    d = orig_shape[-1]
    itemsize = jnp.dtype(x.dtype).itemsize

    x2 = x.reshape(-1, d)
    n_rows = x2.shape[0]

    # Lane padding: keep the last dim a multiple of 128 so output stores are
    # full-lane (unmasked).  Zero pads are harmless: sums are unchanged and the
    # kernel divides by the true d; padded output lanes are sliced off below.
    d_pad = _cdiv(d, 128) * 128
    if d_pad != d:
        x2 = jnp.pad(x2, ((0, 0), (0, d_pad - d)))
        a2 = jnp.pad(a_2.astype(jnp.float32), (0, d_pad - d)).reshape(1, d_pad)
        b2 = jnp.pad(b_2.astype(jnp.float32), (0, d_pad - d)).reshape(1, d_pad)
    else:
        a2 = a_2.astype(jnp.float32).reshape(1, d_pad)
        b2 = b_2.astype(jnp.float32).reshape(1, d_pad)

    is_v7x, vmem_budget, vmem_clamp = _tpu_generation()

    # Sublane alignment: 8 rows for 4-byte, 16 for 2-byte, 32 for 1-byte dtypes.
    sub = max(8, 32 // itemsize)

    # Row tile: target >= ~4 MiB of x per grid step (streaming kernels saturate
    # HBM around >= 2 MiB/step; each step pays ~0.35 us fixed overhead), capped
    # by the per-generation VMEM budget.
    row_bytes = d_pad * itemsize
    target_step_bytes = 4 << 20
    # Per-row VMEM of one pipelined step: double-buffered in + out in the model
    # dtype plus ~2 (br, d)-sized f32 intermediates in the body.
    bytes_per_row = d_pad * (4 * itemsize + 2 * 4)
    if block_rows is None:
        br_target = max(sub, (target_step_bytes // max(row_bytes, 1)) // sub * sub)
        br_max = max(sub, (vmem_budget // max(bytes_per_row, 1)) // sub * sub)
        br = min(br_target, br_max)
    else:
        br = max(sub, (block_rows // sub) * sub)

    # Never larger than the (sublane-aligned) row count.
    br = min(br, _cdiv(n_rows, sub) * sub)

    # v7x only: the ("parallel",) grid axis is sharded across two TensorCores,
    # so prefer an even step count (or >= 8) for balanced per-core rows.  On
    # single-TC parts (v5e/v6e) splitting a one-step problem only adds overhead.
    if is_v7x and n_rows > sub:
        for _ in range(4):
            steps = _cdiv(n_rows, br)
            if steps >= 8 or (steps >= 2 and steps % 2 == 0):
                break
            want = 2 if steps < 2 else steps + 1      # next even step count
            new_br = max(sub, _cdiv(_cdiv(n_rows, want), sub) * sub)
            if new_br == br:
                break
            br = new_br

    grid = (_cdiv(n_rows, br),)

    # Deepen the x pipeline when per-step DMA is very short (v7x: 3.2 TB/s makes
    # small steps issue-latency rather than bandwidth bound).
    extra_buf = 0
    if is_v7x and grid[0] >= 4 and br * row_bytes <= (2 << 20):
        x_spec = pl.BlockSpec((br, d_pad), lambda i: (i, 0),
                              pipeline_mode=pl.Buffered(3))
        extra_buf = br * row_bytes
    else:
        x_spec = pl.BlockSpec((br, d_pad), lambda i: (i, 0))

    in_specs = [
        x_spec,
        pl.BlockSpec(memory_space=pltpu.MemorySpace.VMEM),   # a_2: whole, resident
        pl.BlockSpec(memory_space=pltpu.MemorySpace.VMEM),   # b_2: whole, resident
    ]
    args = [x2, a2, b2]

    dynamic_eps = bool(pb_relax)
    if dynamic_eps:
        # torch pb_relax: LN(x / s) with s = max|x|/8.  Algebraically identical
        # to LN(x) with eps' = eps * s^2, so no per-element rescale is needed and
        # x is never rewritten.  The global max itself still costs one extra read
        # pass over x; that is inherent to the module's global-max semantics.
        # TODO(synk): fuse the |x| max into the producer op to drop that pass.
        s = jnp.max(jnp.abs(x)).astype(jnp.float32) / 8.0
        eps_arr = (jnp.float32(eps) * s * s).reshape(1)
        in_specs.insert(0, pl.BlockSpec(memory_space=pltpu.MemorySpace.SMEM))
        args.insert(0, eps_arr)

    # Scoped-VMEM limit sized to the chosen tile (+ params + headroom), clamped
    # per generation (<=48 MiB on v7x's 64 MiB VMEM, <=96 MiB on 128 MiB parts).
    vmem_limit = br * bytes_per_row + extra_buf + 4 * d_pad * 4 + (2 << 20)
    vmem_limit = int(min(max(vmem_limit, 32 << 20), vmem_clamp))

    kernel = functools.partial(
        _layernorm_kernel, eps=float(eps), d_true=d, dynamic_eps=dynamic_eps)

    out = pl.pallas_call(
        kernel,
        out_shape=jax.ShapeDtypeStruct((n_rows, d_pad), x.dtype),
        grid_spec=pltpu.PrefetchScalarGridSpec(
            num_scalar_prefetch=0,
            grid=grid,
            in_specs=in_specs,
            out_specs=pl.BlockSpec((br, d_pad), lambda i: (i, 0)),
        ),
        compiler_params=pltpu.CompilerParams(
            dimension_semantics=("parallel",),
            vmem_limit_bytes=vmem_limit,
        ),
    )(*args)

    if d_pad != d:
        out = out[:, :d]
    return out.reshape(orig_shape)


def _layer_norm_ref(x, a_2, b_2, eps=1e-5, pb_relax=False):
    if pb_relax:
        x = x / (jnp.max(jnp.abs(x)) / 8.0)
    mean = jnp.mean(x, axis=-1, keepdims=True)
    var = jnp.mean((x - mean) ** 2, axis=-1, keepdims=True)
    std = jnp.sqrt(var + eps)
    return a_2 * (x - mean) / std + b_2


if __name__ == "__main__":
    key = jax.random.PRNGKey(0)
    batch, seq, d_model = 2, 8, 128
    kx, kx2, kx3, kx4 = jax.random.split(key, 4)

    x = jax.random.normal(kx, (batch, seq, d_model), dtype=jnp.float32)
    # Deterministic parameter init matching the module's __init__:
    #   a_2 = ones(d_model), b_2 = zeros(d_model)
    a_2 = jnp.ones((d_model,), dtype=jnp.float32)
    b_2 = jnp.zeros((d_model,), dtype=jnp.float32)

    out = jax.block_until_ready(layer_norm(x, a_2, b_2, eps=1e-5, pb_relax=False))
    ref = _layer_norm_ref(x, a_2, b_2, eps=1e-5, pb_relax=False)
    assert out.shape == x.shape and out.dtype == x.dtype
    assert jnp.allclose(out, ref, atol=1e-5, rtol=1e-5)

    # pb_relax path (fused as an eps rescale inside the kernel).
    out2 = jax.block_until_ready(layer_norm(x, a_2, b_2, eps=1e-5, pb_relax=True))
    ref2 = _layer_norm_ref(x, a_2, b_2, eps=1e-5, pb_relax=True)
    assert jnp.allclose(out2, ref2, atol=1e-5, rtol=1e-5)

    # Odd row count -> cdiv grid + masked partial final row block.
    x_odd = jax.random.normal(kx2, (3, 5, d_model), dtype=jnp.float32)
    out3 = jax.block_until_ready(layer_norm(x_odd, a_2, b_2, eps=1e-5))
    assert jnp.allclose(out3, _layer_norm_ref(x_odd, a_2, b_2), atol=1e-5, rtol=1e-5)

    # Tiny row count (n_rows < sublane tile of 8).
    x_tiny = jax.random.normal(kx3, (1, 3, d_model), dtype=jnp.float32)
    out4 = jax.block_until_ready(layer_norm(x_tiny, a_2, b_2, eps=1e-5))
    assert jnp.allclose(out4, _layer_norm_ref(x_tiny, a_2, b_2), atol=1e-5, rtol=1e-5)

    # d_model not a multiple of 128 -> lane-padded path.
    d_small = 96
    a_s = jnp.ones((d_small,), dtype=jnp.float32)
    b_s = jnp.zeros((d_small,), dtype=jnp.float32)
    x_s = jax.random.normal(kx4, (4, 7, d_small), dtype=jnp.float32)
    out5 = jax.block_until_ready(layer_norm(x_s, a_s, b_s, eps=1e-5))
    assert out5.shape == x_s.shape
    assert jnp.allclose(out5, _layer_norm_ref(x_s, a_s, b_s), atol=1e-5, rtol=1e-5)

    print("KERNEL_OK")
</pallas_src>

<mosaic_0001>
module attributes {stable_mosaic.version = 11 : i64} {
  func.func @_layernorm_kernel(%arg0: i32, %arg1: memref<16x128xf32, #tpu.memory_space<vmem>>, %arg2: memref<1x128xf32, #tpu.memory_space<vmem>>, %arg3: memref<1x128xf32, #tpu.memory_space<vmem>>, %arg4: memref<16x128xf32, #tpu.memory_space<vmem>>) attributes {dimension_semantics = [#tpu.dimension_semantics<parallel>], iteration_bounds = array<i64: 1>, scalar_prefetch = 0 : i64, scratch_operands = 0 : i64, tpu.core_type = #tpu.core_type<tc>, window_params = [{transform_indices = @transform_0, window_bounds = array<i64: 16, 128>}, {pipeline_mode = #tpu.pipeline_mode<synchronous>, transform_indices = @transform_1, window_bounds = array<i64: 1, 128>}, {pipeline_mode = #tpu.pipeline_mode<synchronous>, transform_indices = @transform_2, window_bounds = array<i64: 1, 128>}, {transform_indices = @transform_3, window_bounds = array<i64: 16, 128>}]} {
    %c0 = arith.constant 0 : index
    %c0_0 = arith.constant 0 : index
    %0 = vector.load %arg1[%c0, %c0_0] : memref<16x128xf32, #tpu.memory_space<vmem>>, vector<16x128xf32>
    %cst = arith.constant dense<0.000000e+00> : vector<16xf32>
    %1 = vector.multi_reduction <add>, %0, %cst [1] : vector<16x128xf32> to vector<16xf32>
    %2 = vector.shape_cast %1 : vector<16xf32> to vector<16x1xf32>
    %cst_1 = arith.constant 7.812500e-03 : f32
    %3 = vector.broadcast %cst_1 : f32 to vector<16x1xf32>
    %4 = arith.mulf %2, %3 : vector<16x1xf32>
    %5 = arith.mulf %0, %0 : vector<16x128xf32>
    %cst_2 = arith.constant dense<0.000000e+00> : vector<16xf32>
    %6 = vector.multi_reduction <add>, %5, %cst_2 [1] : vector<16x128xf32> to vector<16xf32>
    %7 = vector.shape_cast %6 : vector<16xf32> to vector<16x1xf32>
    %cst_3 = arith.constant 7.812500e-03 : f32
    %8 = vector.broadcast %cst_3 : f32 to vector<16x1xf32>
    %9 = arith.mulf %7, %8 : vector<16x1xf32>
    %10 = arith.mulf %4, %4 : vector<16x1xf32>
    %11 = arith.subf %9, %10 : vector<16x1xf32>
    %cst_4 = arith.constant 0.000000e+00 : f32
    %12 = vector.broadcast %cst_4 : f32 to vector<16x1xf32>
    %13 = arith.maximumf %11, %12 : vector<16x1xf32>
    %cst_5 = arith.constant 9.99999974E-6 : f32
    %14 = vector.broadcast %cst_5 : f32 to vector<16x1xf32>
    %15 = arith.addf %13, %14 : vector<16x1xf32>
    %16 = math.rsqrt %15 : vector<16x1xf32>
    %17 = vector.broadcast %4 : vector<16x1xf32> to vector<16x128xf32>
    %18 = arith.subf %0, %17 : vector<16x128xf32>
    %19 = vector.broadcast %16 : vector<16x1xf32> to vector<16x128xf32>
    %20 = arith.mulf %18, %19 : vector<16x128xf32>
    %c0_6 = arith.constant 0 : index
    %c0_7 = arith.constant 0 : index
    %21 = vector.load %arg2[%c0_6, %c0_7] : memref<1x128xf32, #tpu.memory_space<vmem>>, vector<1x128xf32>
    %22 = vector.broadcast %21 : vector<1x128xf32> to vector<16x128xf32>
    %23 = arith.mulf %20, %22 : vector<16x128xf32>
    %c0_8 = arith.constant 0 : index
    %c0_9 = arith.constant 0 : index
    %24 = vector.load %arg3[%c0_8, %c0_9] : memref<1x128xf32, #tpu.memory_space<vmem>>, vector<1x128xf32>
    %25 = vector.broadcast %24 : vector<1x128xf32> to vector<16x128xf32>
    %26 = arith.addf %23, %25 : vector<16x128xf32>
    %c0_10 = arith.constant 0 : index
    %c0_11 = arith.constant 0 : index
    %27 = vector.load %arg4[%c0_10, %c0_11] : memref<16x128xf32, #tpu.memory_space<vmem>>, vector<16x128xf32>
    tpu.vector_store %arg4[%c0_10, %c0_11], %26 {strides = array<i32>} : memref<16x128xf32, #tpu.memory_space<vmem>>, vector<16x128xf32>,
    return
  }
  func.func @transform_0(%arg0: i32) -> (i32, i32) {
    %c0_i32 = arith.constant 0 : i32
    %c0_i32_0 = arith.constant 0 : i32
    return %arg0, %c0_i32 : i32, i32
  }
  func.func @transform_1(%arg0: i32) -> (i32, i32) {
    %c0_i32 = arith.constant 0 : i32
    %c0_i32_0 = arith.constant 0 : i32
    %c0_i32_1 = arith.constant 0 : i32
    return %c0_i32, %c0_i32_0 : i32, i32
  }
  func.func @transform_2(%arg0: i32) -> (i32, i32) {
    %c0_i32 = arith.constant 0 : i32
    %c0_i32_0 = arith.constant 0 : i32
    %c0_i32_1 = arith.constant 0 : i32
    return %c0_i32, %c0_i32_0 : i32, i32
  }
  func.func @transform_3(%arg0: i32) -> (i32, i32) {
    %c0_i32 = arith.constant 0 : i32
    %c0_i32_0 = arith.constant 0 : i32
    return %arg0, %c0_i32 : i32, i32
  }
}

</mosaic_0001>

<llo_original>
// kernel: tpu_custom_call.1
$region0: #{tpu_custom_call.1}
  #allocation0 [shape = 'u32[]', space=smem, size = 0x4, offset = 0x4, fixed_abs, tag = 'smem constant byte address 0x4 - core index']
  #allocation1 [shape = 'u32[144,128]{1,0:T(1,128)}', space=vmem, size = 0x12000, scoped, tag = 'internal scratch']
  %s0 = inlined_call_operand.hbm [shape: f32[16,128], index: 0, kind: input, shape index: {}]
  %s1 = inlined_call_operand.vmem [shape: f32[1,128], index: 1, kind: input, shape index: {}]
  %s2 = inlined_call_operand.vmem [shape: f32[1,128], index: 2, kind: input, shape index: {}]
  %s3 = inlined_call_operand.hbm [shape: f32[16,128], index: 3, kind: output, shape index: {}]
  %s4 = sld [smem:[#allocation0]]
  $region26: #{tpu_custom_call.1} parent=0
    _
  %s6 = ssub.s32 1, %s4
  %s7 = scalar_select 0, %s6, %s4
  $region1: #{tpu_custom_call.1} parent=0
    #allocation2 [shape = 'u8[8192]{0}', space=vmem, size = 0x2000, scoped, tag = 'input window, operand 0, single buffered']
    #allocation3 [shape = 's32[1]{0}', space=sflag, size = 0x4, scoped, tag = 'scoped memory for tpu_custom_call.1']
    #allocation4 [shape = 's32[1]{0}', space=sflag, size = 0x4, scoped, tag = 'scoped memory for tpu_custom_call.1']
    #allocation5 [shape = 'u8[8192]{0}', space=vmem, size = 0x2000, scoped, tag = 'output window, operand 0, single buffered']
    %8 = vsyncpa [#allocation3], 0
    %9 = vsyncpa [#allocation4], 0
    // Predicated region
    $region2: #{tpu_custom_call.1} parent=1 // pred_check
      _
    $region3: #{tpu_custom_call.1} parent=1 // pred_check_branch
      %11 = sbr.rel (0) target = $region5
    $region4: #{tpu_custom_call.1} parent=1 // pred_region
      %s13 = ssub.s32 256, 256
      %14 = vsyncadd [#allocation3], %s13
      %s15 = sshll.u32 [#allocation2], 4
      %s16 = int_to_ptr.vmem [resolvable:$true] %s15
      %21 = dma.hbm_to_vmem [thread:$0]  %s0, 256, %s16, [#allocation3], 128, 128, 8
    $region5: #{tpu_custom_call.1} parent=1 // pred_fallthru
      _
    // Predicated region
    $region6: #{tpu_custom_call.1} parent=1 // pred_check
      _
    $region7: #{tpu_custom_call.1} parent=1 // pred_check_branch
      %23 = sbr.rel (0) target = $region9
    $region8: #{tpu_custom_call.1} parent=1 // pred_region
      _
    $region9: #{tpu_custom_call.1} parent=1 // pred_fallthru
      _
    // Predicated region
    $region10: #{tpu_custom_call.1} parent=1 // pred_check
      _
    $region11: #{tpu_custom_call.1} parent=1 // pred_check_branch
      %25 = sbr.rel (0) target = $region13
    $region12: #{tpu_custom_call.1} parent=1 // pred_region
      _
    $region13: #{tpu_custom_call.1} parent=1 // pred_fallthru
      _
    // Predicated region
    $region14: #{tpu_custom_call.1} parent=1 // pred_check
      _
    $region15: #{tpu_custom_call.1} parent=1 // pred_check_branch
      %27 = sbr.rel (0) target = $region17
    $region16: #{tpu_custom_call.1} parent=1 // pred_region
      %28 = dma.done [#allocation3], 256
    $region17: #{tpu_custom_call.1} parent=1 // pred_fallthru
      _
    %v29 = vld [vmem:[#allocation2] sm:$0xff]
    %v30 = vld [vmem:[#allocation2 + $0x8] sm:$0xff]
    %31 = vadd.xlane.f32.xlu0 %v29
    %v32 = vpop.xlane.xlu0 %31
    %33 = vadd.xlane.f32.xlu0 %v30
    %v34 = vpop.xlane.xlu0 %33
    %v35 = vmul.f32 %v32, 0.0078125
    %v36 = vmul.f32 %v34, 0.0078125
    %v37 = vmul.f32 %v29, %v29
    %v38 = vmul.f32 %v30, %v30
    %39 = vadd.xlane.f32.xlu0 %v37
    %v40 = vpop.xlane.xlu0 %39
    %41 = vadd.xlane.f32.xlu0 %v38
    %v42 = vpop.xlane.xlu0 %41
    %v43 = vmul.f32 %v40, 0.0078125
    %v44 = vmul.f32 %v42, 0.0078125
    %v45 = vmul.f32 %v35, %v35
    %v46 = vmul.f32 %v36, %v36
    %v47 = vsub.f32 %v43, %v45
    %v48 = vsub.f32 %v44, %v46
    %v49 = vmax.f32 %v47, 0.0
    %v50 = vmax.f32 %v48, 0.0
    %v51 = vadd.f32 %v49, 1e-05
    %v52 = vadd.f32 %v50, 1e-05
    %v53 = vrsqrt.pop %v51
    %v54 = vrsqrt.pop %v52
    %v55 = vsub.f32 %v29, %v35
    %v56 = vsub.f32 %v30, %v36
    %v57 = vmul.f32 %v55, %v53
    %v58 = vmul.f32 %v56, %v54
    %v59 = vld [vmem:[%s1] sm:$0x1]
    %v61 = vlaneseq
    %v62 = vshrl.u32 %v61, 7
    %v63 = vsub.s32 0, %v62
    %v64 = vrot.slane %v59, %v63
    %v66 = vmul.f32 %v57, %v64
    %v67 = vmul.f32 %v58, %v64
    %v68 = vld [vmem:[%s2] sm:$0x1]
    %v70 = vlaneseq
    %v71 = vshrl.u32 %v70, 7
    %v72 = vsub.s32 0, %v71
    %v73 = vrot.slane %v68, %v72
    %v75 = vadd.f32 %v66, %v73
    %v76 = vadd.f32 %v67, %v73
    %77 = vst [vmem:[#allocation5] sm:$0xff] %v75
    %78 = vst [vmem:[#allocation5 + $0x8] sm:$0xff] %v76
    // Predicated region
    $region18: #{tpu_custom_call.1} parent=1 // pred_check
      _
    $region19: #{tpu_custom_call.1} parent=1 // pred_check_branch
      %80 = sbr.rel (0) target = $region21
    $region20: #{tpu_custom_call.1} parent=1 // pred_region
      %s82 = ssub.s32 256, 256
      %83 = vsyncadd [#allocation4], %s82
      %s84 = sshll.u32 [#allocation5], 4
      %s85 = int_to_ptr.vmem [resolvable:$true] %s84
      %90 = dma.vmem_to_hbm [thread:$0]  %s85, 256, %s3, [#allocation4], 128, 128, 8
    $region21: #{tpu_custom_call.1} parent=1 // pred_fallthru
      _
    // Predicated region
    $region22: #{tpu_custom_call.1} parent=1 // pred_check
      _
    $region23: #{tpu_custom_call.1} parent=1 // pred_check_branch
      %92 = sbr.rel (0) target = $region25
    $region24: #{tpu_custom_call.1} parent=1 // pred_region
      %93 = dma.done [#allocation4], 256
    $region25: #{tpu_custom_call.1} parent=1 // pred_fallthru
      _
    %94 = vsyncpa [#allocation3], 1
    %95 = vsyncpa [#allocation4], 1

</llo_original>
